<compile_context>
chip_gen: v7x
topology: tpu7x:2x2x1
jax: 0.10.0
libtpu: 0.0.40
codegen_flags: <defaults>
</compile_context>

<pallas_src>
import jax
import jax.numpy as jnp
from jax.experimental import pallas as pl
from jax.experimental.pallas import tpu as pltpu


def _round_up(v, m):
    return (v + m - 1) // m * m


# --------------------------------------------------------------------------- #
# Kernels
# --------------------------------------------------------------------------- #
def _ffn_swiglu_kernel_scratch(x_ref, w12_ref, w3_ref, o_ref, acc_ref):
    """Variant with an f32 VMEM scratch accumulator (output dtype != f32)."""
    h = pl.program_id(1)

    @pl.when(h == 0)
    def _init():
        acc_ref[...] = jnp.zeros_like(acc_ref)

    th = w3_ref.shape[0]
    # Fused up + gate projection: one MXU pass -> [tm, 2*th], f32 accumulation.
    hh = jnp.dot(x_ref[...], w12_ref[...], preferred_element_type=jnp.float32)
    h1 = hh[:, :th]              # up projection (128-lane-aligned static split)
    h2 = hh[:, th:]              # gate projection
    g = h1 * jax.nn.sigmoid(h1)  # SiLU in f32 on the VPU/EUP (hidden under MXU)
    g = g * h2
    # Partial down projection, accumulated across hidden tiles in f32 scratch.
    acc_ref[...] += jnp.dot(g.astype(w3_ref.dtype), w3_ref[...],
                            preferred_element_type=jnp.float32)

    @pl.when(h == pl.num_programs(1) - 1)
    def _finalize():
        o_ref[...] = acc_ref[...].astype(o_ref.dtype)


def _ffn_swiglu_kernel_acc_in_out(x_ref, w12_ref, w3_ref, o_ref):
    """Variant for f32 outputs: accumulate straight into the resident output
    block (the output BlockSpec returns the same block index across the h axis),
    saving the f32 scratch and the finalize copy."""
    h = pl.program_id(1)

    @pl.when(h == 0)
    def _init():
        o_ref[...] = jnp.zeros_like(o_ref)

    th = w3_ref.shape[0]
    hh = jnp.dot(x_ref[...], w12_ref[...], preferred_element_type=jnp.float32)
    h1 = hh[:, :th]
    h2 = hh[:, th:]
    g = h1 * jax.nn.sigmoid(h1)
    g = g * h2
    o_ref[...] += jnp.dot(g.astype(w3_ref.dtype), w3_ref[...],
                          preferred_element_type=jnp.float32)


# --------------------------------------------------------------------------- #
# Weight re-layout
# --------------------------------------------------------------------------- #
def prepare_ffn_weights(w1, w2, w3, th, compute_dtype=jnp.bfloat16):
    """Re-layout weights for the kernel.

    w1, w2: [hidden, d_model]; w3: [d_model, hidden].
    Returns
      w12: [d_model, 2*hidden]   W1^T and W2^T interleaved per th-sized chunk so
                                 one [d_model, 2*th] block holds matching
                                 up+gate columns.
      w3t: [hidden, d_model]
    """
    hidden, d_model = w1.shape
    nh = hidden // th
    w1t = w1.T.reshape(d_model, nh, th)
    w2t = w2.T.reshape(d_model, nh, th)
    w12 = jnp.concatenate([w1t, w2t], axis=2).reshape(d_model, 2 * hidden)
    w3t = w3.T
    if compute_dtype is not None:
        w12 = w12.astype(compute_dtype)
        w3t = w3t.astype(compute_dtype)
    return w12, w3t


# --------------------------------------------------------------------------- #
# Tile / VMEM sizing helpers
# --------------------------------------------------------------------------- #
def _vmem_capacity_bytes():
    # Per-generation physical VMEM: 128 MiB on v5e/v6e, 64 MiB per TC on v7x.
    try:
        return int(pltpu.get_tpu_info().vmem_capacity_bytes)
    except Exception:
        return 64 << 20            # conservative fallback (v7x-sized)


def _pick_hidden_tile(hidden, th_req):
    """Largest hidden tile <= th_req that divides `hidden` and is a multiple of
    128 (so the up/gate split lands on a 128-lane vreg boundary); falls back to
    the full hidden dim if no such divisor exists."""
    th = min(th_req, hidden)
    if hidden % th == 0 and (th % 128 == 0 or th == hidden):
        return th
    cands = [d for d in range(128, th + 1, 128) if hidden % d == 0]
    return cands[-1] if cands else hidden


def _vmem_estimate(tm, th, d_model, in_sz, w_sz, out_sz, acc_in_output):
    est = 2 * (tm * d_model * in_sz           # x tile (double buffered)
               + d_model * 2 * th * w_sz      # fused W1/W2 tile
               + th * d_model * w_sz          # W3 tile
               + tm * d_model * out_sz)       # output tile
    if not acc_in_output:
        est += tm * d_model * 4               # f32 accumulator scratch
    est += 3 * tm * 2 * th * 4                # f32 intermediates (hh / gate temps)
    return est


def _fit_tiles(M, d_model, hidden, tm_req, th_req, row_mult,
               in_sz, w_sz, out_sz, acc_in_output, vmem_budget):
    # ---- token tile: big for arithmetic intensity (weights re-stream per tile)
    tm = 512 if tm_req is None else tm_req
    tm = max(row_mult, min(_round_up(tm, row_mult), _round_up(M, row_mult)))
    if tm_req is None and _round_up(M, tm) // tm < 2 and tm > row_mult:
        # Guarantee >= 2 token tiles so both v7x TensorCores get work.
        tm = max(row_mult, _round_up(tm // 2, row_mult))

    # ---- hidden tile: multiple of 128, divisor of hidden ---------------------
    th0 = 512 if th_req is None else th_req
    th = _pick_hidden_tile(hidden, th0)

    def est(tm_, th_):
        return _vmem_estimate(tm_, th_, d_model, in_sz, w_sz, out_sz,
                              acc_in_output)

    if th_req is None or tm_req is None:
        # Shrink auto-chosen tiles until the pipeline fits this generation's VMEM
        # (keeps th=512 on v5e/v6e's 128 MiB, drops toward 256/128 on v7x's 64 MiB).
        while est(tm, th) > vmem_budget:
            if th_req is None and th > 128:
                new_th = _pick_hidden_tile(hidden, max(128, th // 2))
                if new_th < th:
                    th = new_th
                    continue
            if tm_req is None and tm > row_mult:
                tm = max(row_mult, _round_up(tm // 2, row_mult))
                continue
            break
    return tm, th


# --------------------------------------------------------------------------- #
# Wrapper
# --------------------------------------------------------------------------- #
def ffn_swiglu(x, w1, w2, w3, *, tm=None, th=None,
               compute_dtype=jnp.bfloat16, w12_buffers=None,
               vmem_limit_bytes=None):
    """x: [batch, seq, d_model]; w1, w2: [hidden, d_model]; w3: [d_model, hidden].

    compute_dtype: dtype fed to the MXU (default bf16 — native on v5e/v6e/v7x).
                   Accumulation is always f32; output is returned in x.dtype.
    tm, th:        token / hidden tile overrides (None = auto-size to VMEM).
    w12_buffers:   optional deeper pipelining (e.g. 3) for the W1/W2 stream.
    """
    batch, seq, d_model = x.shape
    hidden = w1.shape[0]
    out_dtype = x.dtype
    M = batch * seq

    cdt = jnp.dtype(compute_dtype) if compute_dtype is not None else jnp.dtype(x.dtype)
    in_sz = cdt.itemsize
    w_sz = cdt.itemsize
    out_sz = jnp.dtype(out_dtype).itemsize
    row_mult = 16 if in_sz < 4 else 8          # bf16 packs 2 rows per sublane

    acc_in_output = jnp.dtype(out_dtype) == jnp.dtype(jnp.float32)

    vmem_cap = _vmem_capacity_bytes()
    vmem_budget = int(0.85 * vmem_cap)

    tm, th = _fit_tiles(M, d_model, hidden, tm, th, row_mult,
                        in_sz, w_sz, out_sz, acc_in_output, vmem_budget)
    n_h = hidden // th

    # ---- operand layout ------------------------------------------------------
    x2d = x.reshape(M, d_model)
    if compute_dtype is not None:
        x2d = x2d.astype(compute_dtype)
    M_pad = _round_up(M, tm)
    if M_pad != M:
        x2d = jnp.pad(x2d, ((0, M_pad - M), (0, 0)))

    # TODO(synk): in a real model, hoist this weight re-layout (transpose +
    # per-chunk interleave + bf16 cast) to parameter-load time; per forward call
    # it costs ~3 extra weight HBM round trips and dominates at small M.
    w12, w3t = prepare_ffn_weights(w1, w2, w3, th, compute_dtype)

    # ---- VMEM limit clamped to this generation's physical capacity ----------
    if vmem_limit_bytes is None:
        est = _vmem_estimate(tm, th, d_model, in_sz, w_sz, out_sz, acc_in_output)
        vmem_limit_bytes = int(min(max(int(est * 1.2), 32 << 20),
                                   int(0.92 * vmem_cap)))

    # ---- grid / specs --------------------------------------------------------
    grid = (M_pad // tm, n_h)
    w12_kwargs = {}
    if w12_buffers is not None and w12_buffers != 2:
        w12_kwargs["pipeline_mode"] = pl.Buffered(w12_buffers)
    in_specs = [
        pl.BlockSpec((tm, d_model), lambda i, h: (i, 0)),                   # x
        pl.BlockSpec((d_model, 2 * th), lambda i, h: (0, h), **w12_kwargs),  # W1/W2
        pl.BlockSpec((th, d_model), lambda i, h: (h, 0)),                   # W3 rows
    ]
    out_spec = pl.BlockSpec((tm, d_model), lambda i, h: (i, 0))

    if acc_in_output:
        kernel = _ffn_swiglu_kernel_acc_in_out
        scratch = ()
    else:
        kernel = _ffn_swiglu_kernel_scratch
        scratch = (pltpu.VMEM((tm, d_model), jnp.float32),)

    # Advisory cost for XLA's scheduler: 2 fused up/gate matmuls + down matmul;
    # weights are re-streamed once per token tile.
    cost = pl.CostEstimate(
        flops=6 * M_pad * hidden * d_model,
        transcendentals=M_pad * hidden,
        bytes_accessed=int(M_pad * d_model * (in_sz + out_sz)
                           + 3 * hidden * d_model * w_sz * (M_pad // tm)),
    )

    out2d = pl.pallas_call(
        kernel,
        out_shape=jax.ShapeDtypeStruct((M_pad, d_model), out_dtype),
        grid_spec=pltpu.PrefetchScalarGridSpec(
            num_scalar_prefetch=0,
            grid=grid,
            in_specs=in_specs,
            out_specs=out_spec,
            scratch_shapes=scratch,
        ),
        compiler_params=pltpu.CompilerParams(
            dimension_semantics=("parallel", "arbitrary"),
            vmem_limit_bytes=vmem_limit_bytes,
        ),
        cost_estimate=cost,
    )(x2d, w12, w3t)

    return out2d[:M].reshape(batch, seq, d_model)


def ffn_swiglu_ref(x, w1, w2, w3):
    h1 = x @ w1.T
    h2 = x @ w2.T
    return (h1 * jax.nn.sigmoid(h1) * h2) @ w3.T


if __name__ == "__main__":
    def make_inputs(key, batch, seq, d_model, d_ffn):
        hidden = int(2 * d_ffn / 3)
        kx, k1, k2, k3 = jax.random.split(key, 4)
        x = jax.random.normal(kx, (batch, seq, d_model), dtype=jnp.float32)
        # Deterministic init mimicking nn.Linear default (uniform ±1/sqrt(fan_in)).
        w1 = jax.random.uniform(k1, (hidden, d_model), jnp.float32,
                                -1.0, 1.0) / jnp.sqrt(d_model)
        w2 = jax.random.uniform(k2, (hidden, d_model), jnp.float32,
                                -1.0, 1.0) / jnp.sqrt(d_model)
        w3 = jax.random.uniform(k3, (d_model, hidden), jnp.float32,
                                -1.0, 1.0) / jnp.sqrt(hidden)
        return x, w1, w2, w3

    def check(out, ref, atol, rtol, tag):
        assert out.shape == ref.shape, tag
        assert jnp.allclose(out, ref, atol=atol, rtol=rtol), \
            f"{tag}: max err {jnp.max(jnp.abs(out - ref))}"

    # Case 1: small shapes consistent with the module (hidden = 2*192/3 = 128).
    x, w1, w2, w3 = make_inputs(jax.random.PRNGKey(0),
                                batch=2, seq=8, d_model=128, d_ffn=192)
    ref = ffn_swiglu_ref(x, w1, w2, w3)
    out = jax.block_until_ready(
        ffn_swiglu(x, w1, w2, w3, compute_dtype=jnp.float32))
    check(out, ref, 1e-3, 1e-3, "case1/f32")
    out = jax.block_until_ready(ffn_swiglu(x, w1, w2, w3))   # default bf16 MXU path
    check(out, ref, 5e-2, 5e-2, "case1/bf16")

    # Case 2: exercises token padding (M=40) and hidden-dim tiling/accumulation
    # (hidden=256 with th=128 -> 2 reduction steps), plus the auto-tiled bf16 path.
    x, w1, w2, w3 = make_inputs(jax.random.PRNGKey(1),
                                batch=2, seq=20, d_model=256, d_ffn=384)
    ref = ffn_swiglu_ref(x, w1, w2, w3)
    out = jax.block_until_ready(
        ffn_swiglu(x, w1, w2, w3, tm=32, th=128, compute_dtype=jnp.float32))
    check(out, ref, 1e-3, 1e-3, "case2/f32")
    out = jax.block_until_ready(ffn_swiglu(x, w1, w2, w3))   # auto tiles, bf16
    check(out, ref, 5e-2, 5e-2, "case2/bf16")

    print("KERNEL_OK")
</pallas_src>

<mosaic_0001>
module attributes {stable_mosaic.version = 11 : i64} {
  func.func @_ffn_swiglu_kernel_acc_in_out(%arg0: i32, %arg1: i32, %arg2: memref<8x128xf32, #tpu.memory_space<vmem>>, %arg3: memref<128x256xf32, #tpu.memory_space<vmem>>, %arg4: memref<128x128xf32, #tpu.memory_space<vmem>>, %arg5: memref<8x128xf32, #tpu.memory_space<vmem>>) attributes {dimension_semantics = [#tpu.dimension_semantics<parallel>, #tpu.dimension_semantics<arbitrary>], iteration_bounds = array<i64: 2, 1>, scalar_prefetch = 0 : i64, scratch_operands = 0 : i64, tpu.core_type = #tpu.core_type<tc>, window_params = [{transform_indices = @transform_0, window_bounds = array<i64: 8, 128>}, {transform_indices = @transform_1, window_bounds = array<i64: 128, 256>}, {transform_indices = @transform_2, window_bounds = array<i64: 128, 128>}, {transform_indices = @transform_3, window_bounds = array<i64: 8, 128>}]} {
    %c0_i32 = arith.constant 0 : i32
    %0 = arith.cmpi eq, %arg1, %c0_i32 : i32
    %1 = arith.extui %0 : i1 to i32
    %c0_i32_0 = arith.constant 0 : i32
    %2 = arith.cmpi ne, %1, %c0_i32_0 : i32
    scf.if %2 {
      %cst_12 = arith.constant 0.000000e+00 : f32
      %20 = vector.broadcast %cst_12 : f32 to vector<8x128xf32>
      %c0_13 = arith.constant 0 : index
      %c0_14 = arith.constant 0 : index
      %21 = vector.load %arg5[%c0_13, %c0_14] : memref<8x128xf32, #tpu.memory_space<vmem>>, vector<8x128xf32>
      tpu.vector_store %arg5[%c0_13, %c0_14], %20 {strides = array<i32>} : memref<8x128xf32, #tpu.memory_space<vmem>>, vector<8x128xf32>,
    } else {
    }
    %c0 = arith.constant 0 : index
    %c0_1 = arith.constant 0 : index
    %3 = vector.load %arg2[%c0, %c0_1] : memref<8x128xf32, #tpu.memory_space<vmem>>, vector<8x128xf32>
    %c0_2 = arith.constant 0 : index
    %c0_3 = arith.constant 0 : index
    %4 = vector.load %arg3[%c0_2, %c0_3] : memref<128x256xf32, #tpu.memory_space<vmem>>, vector<128x256xf32>
    %cst = arith.constant dense<0.000000e+00> : vector<8x256xf32>
    %5 = tpu.matmul %3, %4, %cst {dimension_numbers = #tpu.dot_dimension_numbers<[1], [0], [0], [1], [0, 0, 1, 1], [], []>} : vector<8x128xf32>, vector<128x256xf32>, vector<8x256xf32> -> vector<8x256xf32>
    %6 = vector.extract_strided_slice %5 {offsets = [0, 0], sizes = [8, 128], strides = [1, 1]} : vector<8x256xf32> to vector<8x128xf32>
    %7 = vector.extract_strided_slice %5 {offsets = [0, 128], sizes = [8, 128], strides = [1, 1]} : vector<8x256xf32> to vector<8x128xf32>
    %8 = arith.negf %6 : vector<8x128xf32>
    %9 = math.exp %8 : vector<8x128xf32>
    %cst_4 = arith.constant 1.000000e+00 : f32
    %10 = vector.broadcast %cst_4 : f32 to vector<8x128xf32>
    %11 = arith.addf %10, %9 : vector<8x128xf32>
    %12 = arith.divf %10, %11 : vector<8x128xf32>
    %13 = arith.mulf %6, %12 : vector<8x128xf32>
    %14 = arith.mulf %13, %7 : vector<8x128xf32>
    %c0_5 = arith.constant 0 : index
    %c0_6 = arith.constant 0 : index
    %15 = vector.load %arg5[%c0_5, %c0_6] : memref<8x128xf32, #tpu.memory_space<vmem>>, vector<8x128xf32>
    %c0_7 = arith.constant 0 : index
    %c0_8 = arith.constant 0 : index
    %16 = vector.load %arg4[%c0_7, %c0_8] : memref<128x128xf32, #tpu.memory_space<vmem>>, vector<128x128xf32>
    %cst_9 = arith.constant dense<0.000000e+00> : vector<8x128xf32>
    %17 = tpu.matmul %14, %16, %cst_9 {dimension_numbers = #tpu.dot_dimension_numbers<[1], [0], [0], [1], [0, 0, 1, 1], [], []>} : vector<8x128xf32>, vector<128x128xf32>, vector<8x128xf32> -> vector<8x128xf32>
    %18 = arith.addf %15, %17 : vector<8x128xf32>
    %c0_10 = arith.constant 0 : index
    %c0_11 = arith.constant 0 : index
    %19 = vector.load %arg5[%c0_10, %c0_11] : memref<8x128xf32, #tpu.memory_space<vmem>>, vector<8x128xf32>
    tpu.vector_store %arg5[%c0_10, %c0_11], %18 {strides = array<i32>} : memref<8x128xf32, #tpu.memory_space<vmem>>, vector<8x128xf32>,
    return
  }
  func.func @transform_0(%arg0: i32, %arg1: i32) -> (i32, i32) {
    %c0_i32 = arith.constant 0 : i32
    %c0_i32_0 = arith.constant 0 : i32
    return %arg0, %c0_i32 : i32, i32
  }
  func.func @transform_1(%arg0: i32, %arg1: i32) -> (i32, i32) {
    %c0_i32 = arith.constant 0 : i32
    %c0_i32_0 = arith.constant 0 : i32
    return %c0_i32, %arg1 : i32, i32
  }
  func.func @transform_2(%arg0: i32, %arg1: i32) -> (i32, i32) {
    %c0_i32 = arith.constant 0 : i32
    %c0_i32_0 = arith.constant 0 : i32
    return %arg1, %c0_i32 : i32, i32
  }
  func.func @transform_3(%arg0: i32, %arg1: i32) -> (i32, i32) {
    %c0_i32 = arith.constant 0 : i32
    %c0_i32_0 = arith.constant 0 : i32
    return %arg0, %c0_i32 : i32, i32
  }
}

</mosaic_0001>

<llo_original>
// kernel: tpu_custom_call.1
$region0: #{tpu_custom_call.1}
  #allocation0 [shape = 'u32[]', space=smem, size = 0x4, offset = 0x4, fixed_abs, tag = 'smem constant byte address 0x4 - core index']
  #allocation1 [shape = 'u32[144,128]{1,0:T(1,128)}', space=vmem, size = 0x12000, scoped, tag = 'internal scratch']
  %s0 = inlined_call_operand.hbm [shape: f32[16,128], index: 0, kind: input, shape index: {}]
  %s1 = inlined_call_operand.hbm [shape: f32[128,256], index: 1, kind: input, shape index: {}]
  %s2 = inlined_call_operand.hbm [shape: f32[128,128], index: 2, kind: input, shape index: {}]
  %s3 = inlined_call_operand.hbm [shape: f32[16,128], index: 3, kind: output, shape index: {}]
  %s4 = sld [smem:[#allocation0]]
  $region61: #{tpu_custom_call.1} parent=0
    _
  %s6 = ssub.s32 1, %s4
  %s7 = scalar_select 0, %s6, %s4
  $region1: #{tpu_custom_call.1} parent=0
    #allocation2 [shape = 'u8[8192]{0}', space=vmem, size = 0x2000, scoped, tag = 'input window, operand 0']
    #allocation3 [shape = 's32[2]{0}', space=sflag, size = 0x8, scoped, tag = 'scoped memory for tpu_custom_call.1']
    #allocation4 [shape = 's32[2]{0}', space=sflag, size = 0x8, scoped, tag = 'scoped memory for tpu_custom_call.1']
    #allocation5 [shape = 'u8[131072]{0}', space=vmem, size = 0x20000, scoped, tag = 'input window, operand 1, single buffered']
    #allocation6 [shape = 's32[1]{0}', space=sflag, size = 0x4, scoped, tag = 'scoped memory for tpu_custom_call.1']
    #allocation7 [shape = 'u8[65536]{0}', space=vmem, size = 0x10000, scoped, tag = 'input window, operand 2, single buffered']
    #allocation8 [shape = 'u8[8192]{0}', space=vmem, size = 0x2000, scoped, tag = 'output window, operand 0']
    %8 = vsyncpa [#allocation3], 0
    %s9 = scalar_lea.sflag [#allocation3], 1
    %10 = vsyncpa %s9, 0
    %11 = vsyncpa [#allocation6], 0
    %12 = vsyncpa [#allocation4], 0
    %s13 = scalar_lea.sflag [#allocation4], 1
    %14 = vsyncpa %s13, 0
    loop: start=0, step=1, limit=4
    $region2: #{tpu_custom_call.1} parent=1 // loop_pre_header
      _
    $region3: #{tpu_custom_call.1} parent=1 // loop_header
      %s16 = sphi 0, %s20
      %p17 = scmp.ge.s32.totalorder %s16, 4
      %s23 = sphi 0, %s35
      %s24 = sphi 0, %s31
      %s25 = sphi 0, %s23
      %s26 = sphi 0, %s24
      %s27 = sphi 0, %s25
      %s28 = sphi 0, %s26
      %s38 = sphi 0, %s40
      %s41 = sphi 0, %s38
      %s42 = sphi 0, %s41
      %s58 = sphi 0, %s42
      %s64 = sphi 0, %s66
      %s67 = sphi 0, %s64
      %s68 = sphi 0, %s67
      %s84 = sphi 0, %s68
      %s90 = sphi 0, %s92
      %s93 = sphi 0, %s90
      %s94 = sphi 0, %s93
      %s110 = sphi 0, %s94
      %s116 = sphi 0, %s118
      %s119 = sphi 0, %s116
      %s120 = sphi 0, %s119
      %s136 = sphi 0, %s120
    $region4: #{tpu_custom_call.1} parent=1 // loop_header_branch
      %19 = sbr.rel (%p17) target = $region8
    $region5: #{tpu_custom_call.1} parent=1 // loop_body
      %s21 = ssub.s32 %s16, 1
      %s22 = ssub.s32 %s16, 2
      %s29 = sadd.s32 1, %s24
      %p30 = scmp.ge.s32.totalorder %s29, 1
      %s31 = scalar_select %p30, 0, %s29
      %s32 = sadd.s32 1, %s23
      %s33 = scalar_select %p30, %s32, %s23
      %p34 = scmp.ge.s32.totalorder %s33, 2
      %s35 = scalar_select %p34, 0, %s33
      %s36 = ssub.s32 %s23, %s35
      %p37 = scmp.eq.s32.totalorder %s36, 0
      %s39 = sadd.s32 %s38, 1
      %s40 = scalar_select %p37, %s38, %s39
      %p43 = pneg %p37
      %p44 = scmp.eq.s32.totalorder %s16, 1
      %p45 = por %p43, %p44
      %p46 = scmp.ne.s32.totalorder %s38, %s41
      %p47 = scmp.eq.s32.totalorder %s16, 0
      %p48 = por %p46, %p47
      %p49 = scmp.ne.s32.totalorder %s38, %s41
      %p50 = scmp.eq.s32.totalorder %s21, 1
      %p51 = por %p49, %p50
      %p52 = scmp.ne.s32.totalorder %s41, %s42
      %p53 = scmp.eq.s32.totalorder %s21, 0
      %p54 = por %p52, %p53
      %p55 = scmp.ne.s32.totalorder %s41, %s42
      %p56 = scmp.eq.s32.totalorder %s22, 1
      %p57 = por %p55, %p56
      %p59 = scmp.ne.s32.totalorder %s42, %s58
      %p60 = scmp.eq.s32.totalorder %s22, 0
      %p61 = por %p59, %p60
      %s62 = ssub.s32 %s24, %s31
      %p63 = scmp.eq.s32.totalorder %s62, 0
      %s65 = sadd.s32 %s64, 1
      %s66 = scalar_select %p63, %s64, %s65
      %p69 = pneg %p63
      %p70 = scmp.eq.s32.totalorder %s16, 1
      %p71 = por %p69, %p70
      %p72 = scmp.ne.s32.totalorder %s64, %s67
      %p73 = scmp.eq.s32.totalorder %s16, 0
      %p74 = por %p72, %p73
      %p75 = scmp.ne.s32.totalorder %s64, %s67
      %p76 = scmp.eq.s32.totalorder %s21, 1
      %p77 = por %p75, %p76
      %p78 = scmp.ne.s32.totalorder %s67, %s68
      %p79 = scmp.eq.s32.totalorder %s21, 0
      %p80 = por %p78, %p79
      %p81 = scmp.ne.s32.totalorder %s67, %s68
      %p82 = scmp.eq.s32.totalorder %s22, 1
      %p83 = por %p81, %p82
      %p85 = scmp.ne.s32.totalorder %s68, %s84
      %p86 = scmp.eq.s32.totalorder %s22, 0
      %p87 = por %p85, %p86
      %s88 = ssub.s32 %s24, %s31
      %p89 = scmp.eq.s32.totalorder %s88, 0
      %s91 = sadd.s32 %s90, 1
      %s92 = scalar_select %p89, %s90, %s91
      %p95 = pneg %p89
      %p96 = scmp.eq.s32.totalorder %s16, 1
      %p97 = por %p95, %p96
      %p98 = scmp.ne.s32.totalorder %s90, %s93
      %p99 = scmp.eq.s32.totalorder %s16, 0
      %p100 = por %p98, %p99
      %p101 = scmp.ne.s32.totalorder %s90, %s93
      %p102 = scmp.eq.s32.totalorder %s21, 1
      %p103 = por %p101, %p102
      %p104 = scmp.ne.s32.totalorder %s93, %s94
      %p105 = scmp.eq.s32.totalorder %s21, 0
      %p106 = por %p104, %p105
      %p107 = scmp.ne.s32.totalorder %s93, %s94
      %p108 = scmp.eq.s32.totalorder %s22, 1
      %p109 = por %p107, %p108
      %p111 = scmp.ne.s32.totalorder %s94, %s110
      %p112 = scmp.eq.s32.totalorder %s22, 0
      %p113 = por %p111, %p112
      %s114 = ssub.s32 %s23, %s35
      %p115 = scmp.eq.s32.totalorder %s114, 0
      %s117 = sadd.s32 %s116, 1
      %s118 = scalar_select %p115, %s116, %s117
      %p121 = pneg %p115
      %p122 = scmp.eq.s32.totalorder %s16, 1
      %p123 = por %p121, %p122
      %p124 = scmp.ne.s32.totalorder %s116, %s119
      %p125 = scmp.eq.s32.totalorder %s16, 0
      %p126 = por %p124, %p125
      %p127 = scmp.ne.s32.totalorder %s116, %s119
      %p128 = scmp.eq.s32.totalorder %s21, 1
      %p129 = por %p127, %p128
      %p130 = scmp.ne.s32.totalorder %s119, %s120
      %p131 = scmp.eq.s32.totalorder %s21, 0
      %p132 = por %p130, %p131
      %p133 = scmp.ne.s32.totalorder %s119, %s120
      %p134 = scmp.eq.s32.totalorder %s22, 1
      %p135 = por %p133, %p134
      %p137 = scmp.ne.s32.totalorder %s120, %s136
      %p138 = scmp.eq.s32.totalorder %s22, 0
      %p139 = por %p137, %p138
      %p140 = scmp.le.s32.totalorder 1, %s16
      %p141 = scmp.lt.s32.totalorder %s16, 3
      %p142 = pnand %p140, %p141
      %p143 = pneg %p142
      // Predicated region
      $region9: #{tpu_custom_call.1} parent=5 // pred_check
        _
      $region10: #{tpu_custom_call.1} parent=5 // pred_check_branch
        %145 = sbr.rel (%p142) target = $region12
      $region11: #{tpu_custom_call.1} parent=5 // pred_region
        %s146 = ssub.s32 %s16, 1
        // Predicated region
        $region13: #{tpu_custom_call.1} parent=11 // pred_check
          %p147 = pneg %p80
        $region14: #{tpu_custom_call.1} parent=11 // pred_check_branch
          %149 = sbr.rel (%p147) target = $region16
        $region15: #{tpu_custom_call.1} parent=11 // pred_region
          %s150 = smul.u32 2, %s26
          %s152 = ssub.s32 4096, 4096
          %153 = vsyncadd [#allocation6], %s152
          %s154 = smul.addr %s150, 128
          %s155 = scalar_lea.hbm %s1, %s154
          %s156 = sshll.u32 [#allocation5], 4
          %s157 = int_to_ptr.vmem [resolvable:$true] %s156
          %162 = dma.hbm_to_vmem [thread:$0]  %s155, 4096, %s157, [#allocation6], 256, 256, 16
        $region16: #{tpu_custom_call.1} parent=11 // pred_fallthru
          _
        // Predicated region
        $region17: #{tpu_custom_call.1} parent=11 // pred_check
          %p163 = pneg %p106
        $region18: #{tpu_custom_call.1} parent=11 // pred_check_branch
          %165 = sbr.rel (%p163) target = $region20
        $region19: #{tpu_custom_call.1} parent=11 // pred_region
          %s166 = smul.u32 16, %s26
          %s168 = ssub.s32 2048, 2048
          %169 = vsyncadd [#allocation6], %s168
          %s170 = smul.addr %s166, 128
          %s171 = scalar_lea.hbm %s2, %s170
          %s172 = sshll.u32 [#allocation7], 4
          %s173 = int_to_ptr.vmem [resolvable:$true] %s172
          %178 = dma.hbm_to_vmem [thread:$0]  %s171, 2048, %s173, [#allocation6], 128, 128, 8
        $region20: #{tpu_custom_call.1} parent=11 // pred_fallthru
          _
      $region12: #{tpu_custom_call.1} parent=5 // pred_fallthru
        _
      %p179 = scmp.lt.s32.totalorder %s16, 2
      // Predicated region
      $region21: #{tpu_custom_call.1} parent=5 // pred_check
        %p180 = pneg %p179
      $region22: #{tpu_custom_call.1} parent=5 // pred_check_branch
        %182 = sbr.rel (%p180) target = $region24
      $region23: #{tpu_custom_call.1} parent=5 // pred_region
        // Predicated region
        $region25: #{tpu_custom_call.1} parent=23 // pred_check
          %p183 = pneg %p48
        $region26: #{tpu_custom_call.1} parent=23 // pred_check_branch
          %185 = sbr.rel (%p183) target = $region28
        $region27: #{tpu_custom_call.1} parent=23 // pred_region
          %s186 = sand.u32 %s38, 1
          %s187 = scalar_lea.sflag [#allocation3], %s186
          %s188 = sand.u32 %s38, 1
          %s189 = smul.addr %s188, 8
          %s190 = scalar_lea.vmem [#allocation2], %s189
          %s192 = ssub.s32 128, 128
          %193 = vsyncadd %s187, %s192
          %s194 = smul.addr %s23, 128
          %s195 = scalar_lea.hbm %s0, %s194
          %s197 = sshll.u32 %s190, 4
          %s198 = int_to_ptr.vmem [resolvable:$true] %s197
          %200 = dma.hbm_to_vmem [thread:$0]  %s195, 128, %s198, %s187
        $region28: #{tpu_custom_call.1} parent=23 // pred_fallthru
          _
      $region24: #{tpu_custom_call.1} parent=5 // pred_fallthru
        _
      %p201 = scmp.le.s32.totalorder 1, %s16
      %p202 = scmp.lt.s32.totalorder %s16, 3
      %p203 = pnand %p201, %p202
      %p204 = pneg %p203
      // Predicated region
      $region29: #{tpu_custom_call.1} parent=5 // pred_check
        _
      $region30: #{tpu_custom_call.1} parent=5 // pred_check_branch
        %206 = sbr.rel (%p203) target = $region32
      $region31: #{tpu_custom_call.1} parent=5 // pred_region
        %s207 = ssub.s32 %s16, 1
        %s208 = sand.u32 %s41, 1
        %s209 = scalar_lea.sflag [#allocation3], %s208
        %s210 = sand.u32 %s41, 1
        %s211 = smul.addr %s210, 8
        %s212 = scalar_lea.vmem [#allocation2], %s211
        // Predicated region
        $region33: #{tpu_custom_call.1} parent=31 // pred_check
          %p213 = pneg %p54
        $region34: #{tpu_custom_call.1} parent=31 // pred_check_branch
          %215 = sbr.rel (%p213) target = $region36
        $region35: #{tpu_custom_call.1} parent=31 // pred_region
          %216 = dma.done %s209, 128
        $region36: #{tpu_custom_call.1} parent=31 // pred_fallthru
          _
        // Predicated region
        $region37: #{tpu_custom_call.1} parent=31 // pred_check
          %p217 = pneg %p80
        $region38: #{tpu_custom_call.1} parent=31 // pred_check_branch
          %219 = sbr.rel (%p217) target = $region40
        $region39: #{tpu_custom_call.1} parent=31 // pred_region
          %220 = dma.done [#allocation6], 4096
        $region40: #{tpu_custom_call.1} parent=31 // pred_fallthru
          _
        // Predicated region
        $region41: #{tpu_custom_call.1} parent=31 // pred_check
          %p221 = pneg %p106
        $region42: #{tpu_custom_call.1} parent=31 // pred_check_branch
          %223 = sbr.rel (%p221) target = $region44
        $region43: #{tpu_custom_call.1} parent=31 // pred_region
          %224 = dma.done [#allocation6], 2048
        $region44: #{tpu_custom_call.1} parent=31 // pred_fallthru
          _
        %s225 = sand.u32 %s41, 1
        %s226 = scalar_lea.sflag [#allocation3], %s225
        %s227 = sand.u32 %s41, 1
        %s228 = smul.addr %s227, 8
        %s229 = scalar_lea.vmem [#allocation2], %s228
        %p230 = pneg %p54
        %p231 = pneg %p51
        %p232 = pneg %p80
        %p233 = pneg %p77
        %p234 = pneg %p106
        %p235 = pneg %p103
        %p236 = pneg %p132
        %p237 = pneg %p129
        %s238 = sand.u32 %s119, 1
        %s239 = scalar_lea.sflag [#allocation4], %s238
        %s240 = sand.u32 %s119, 1
        %s241 = smul.addr %s240, 8
        %s242 = scalar_lea.vmem [#allocation8], %s241
        %s243 = smul.u32 2, %s26
        %s244 = smul.u32 16, %s26
        %p245 = scmp.eq.s32.totalorder %s26, 0
        // Predicated region
        $region45: #{tpu_custom_call.1} parent=31 // pred_check
          %p246 = pneg %p245
        $region46: #{tpu_custom_call.1} parent=31 // pred_check_branch
          %248 = sbr.rel (%p246) target = $region48
        $region47: #{tpu_custom_call.1} parent=31 // pred_region
          %249 = vst [vmem:[%s242] sm:$0xff] 0.0
        $region48: #{tpu_custom_call.1} parent=31 // pred_fallthru
          _
        %v250 = vld [vmem:[%s212] sm:$0xff]
        %v251 = vld [vmem:[#allocation5] sm:$0xff]
        %v252 = vld [vmem:[#allocation5 + $0x8] sm:$0xff]
        %v253 = vld [vmem:[#allocation5 + $0x10] sm:$0xff]
        %v254 = vld [vmem:[#allocation5 + $0x18] sm:$0xff]
        %v255 = vld [vmem:[#allocation5 + $0x20] sm:$0xff]
        %v256 = vld [vmem:[#allocation5 + $0x28] sm:$0xff]
        %v257 = vld [vmem:[#allocation5 + $0x30] sm:$0xff]
        %v258 = vld [vmem:[#allocation5 + $0x38] sm:$0xff]
        %v259 = vld [vmem:[#allocation5 + $0x40] sm:$0xff]
        %v260 = vld [vmem:[#allocation5 + $0x48] sm:$0xff]
        %v261 = vld [vmem:[#allocation5 + $0x50] sm:$0xff]
        %v262 = vld [vmem:[#allocation5 + $0x58] sm:$0xff]
        %v263 = vld [vmem:[#allocation5 + $0x60] sm:$0xff]
        %v264 = vld [vmem:[#allocation5 + $0x68] sm:$0xff]
        %v265 = vld [vmem:[#allocation5 + $0x70] sm:$0xff]
        %v266 = vld [vmem:[#allocation5 + $0x78] sm:$0xff]
        %v267 = vld [vmem:[#allocation5 + $0x80] sm:$0xff]
        %v268 = vld [vmem:[#allocation5 + $0x88] sm:$0xff]
        %v269 = vld [vmem:[#allocation5 + $0x90] sm:$0xff]
        %v270 = vld [vmem:[#allocation5 + $0x98] sm:$0xff]
        %v271 = vld [vmem:[#allocation5 + $0xa0] sm:$0xff]
        %v272 = vld [vmem:[#allocation5 + $0xa8] sm:$0xff]
        %v273 = vld [vmem:[#allocation5 + $0xb0] sm:$0xff]
        %v274 = vld [vmem:[#allocation5 + $0xb8] sm:$0xff]
        %v275 = vld [vmem:[#allocation5 + $0xc0] sm:$0xff]
        %v276 = vld [vmem:[#allocation5 + $0xc8] sm:$0xff]
        %v277 = vld [vmem:[#allocation5 + $0xd0] sm:$0xff]
        %v278 = vld [vmem:[#allocation5 + $0xd8] sm:$0xff]
        %v279 = vld [vmem:[#allocation5 + $0xe0] sm:$0xff]
        %v280 = vld [vmem:[#allocation5 + $0xe8] sm:$0xff]
        %v281 = vld [vmem:[#allocation5 + $0xf0] sm:$0xff]
        %v282 = vld [vmem:[#allocation5 + $0xf8] sm:$0xff]
        %283 = vmatprep.subr.mxu0 %v252
        %284 = vmatpush1.msra.mxu0 %v251
        %285 = vmatprep.subr.mxu0 %v254
        %286 = vmatpush1.msra.mxu0 %v253
        %287 = vmatprep.subr.mxu0 %v256
        %288 = vmatpush1.msra.mxu0 %v255
        %289 = vmatprep.subr.mxu0 %v258
        %290 = vmatpush1.msra.mxu0 %v257
        %291 = vmatprep.subr.mxu0 %v260
        %292 = vmatpush1.msra.mxu0 %v259
        %293 = vmatprep.subr.mxu0 %v262
        %294 = vmatpush1.msra.mxu0 %v261
        %295 = vmatprep.subr.mxu0 %v264
        %296 = vmatpush1.msra.mxu0 %v263
        %297 = vmatprep.subr.mxu0 %v266
        %298 = vmatpush1.msra.mxu0 %v265
        %299 = vmatprep.subr.mxu0 %v268
        %300 = vmatpush1.msra.mxu0 %v267
        %301 = vmatprep.subr.mxu0 %v270
        %302 = vmatpush1.msra.mxu0 %v269
        %303 = vmatprep.subr.mxu0 %v272
        %304 = vmatpush1.msra.mxu0 %v271
        %305 = vmatprep.subr.mxu0 %v274
        %306 = vmatpush1.msra.mxu0 %v273
        %307 = vmatprep.subr.mxu0 %v276
        %308 = vmatpush1.msra.mxu0 %v275
        %309 = vmatprep.subr.mxu0 %v278
        %310 = vmatpush1.msra.mxu0 %v277
        %311 = vmatprep.subr.mxu0 %v280
        %312 = vmatpush1.msra.mxu0 %v279
        %313 = vmatprep.subr.mxu0 %v282
        %314 = vmatpush1.msra.mxu0 %v281
        %315 = vmatprep.subr.mxu0 0.0
        %316 = vmatpush1.msra.mxu0 0.0
        %317 = vmatprep.subr.mxu0 0.0
        %318 = vmatpush1.msra.mxu0 0.0
        %319 = vmatprep.subr.mxu0 0.0
        %320 = vmatpush1.msra.mxu0 0.0
        %321 = vmatprep.subr.mxu0 0.0
        %322 = vmatpush1.msra.mxu0 0.0
        %323 = vmatprep.subr.mxu0 0.0
        %324 = vmatpush1.msra.mxu0 0.0
        %325 = vmatprep.subr.mxu0 0.0
        %326 = vmatpush1.msra.mxu0 0.0
        %327 = vmatprep.subr.mxu0 0.0
        %328 = vmatpush1.msra.mxu0 0.0
        %329 = vmatprep.subr.mxu0 0.0
        %330 = vmatpush1.msra.mxu0 0.0
        %331 = vmatprep.subr.mxu0 0.0
        %332 = vmatpush1.msra.mxu0 0.0
        %333 = vmatprep.subr.mxu0 0.0
        %334 = vmatpush1.msra.mxu0 0.0
        %335 = vmatprep.subr.mxu0 0.0
        %336 = vmatpush1.msra.mxu0 0.0
        %337 = vmatprep.subr.mxu0 0.0
        %338 = vmatpush1.msra.mxu0 0.0
        %339 = vmatprep.subr.mxu0 0.0
        %340 = vmatpush1.msra.mxu0 0.0
        %341 = vmatprep.subr.mxu0 0.0
        %342 = vmatpush1.msra.mxu0 0.0
        %343 = vmatprep.subr.mxu0 0.0
        %344 = vmatpush1.msra.mxu0 0.0
        %345 = vmatprep.subr.mxu0 0.0
        %346 = vmatpush1.msra.mxu0 0.0
        %347 = vmatprep.mubr.f32.mxu0 0.0
        %348 = vmatmul.mubr.f32.gmra.mrb[0].mxu0 %v250
        %v349 = vpop.f32.mrb[0].mxu0
        %v350 = vadd.f32 0.0, %v349
        %v351 = vpop.f32.mrb[0].mxu0
        %v352 = vadd.f32 0.0, %v351
        %353 = vdwg.mxu0
        %v354 = vxor.u32 %v350, 2147483648
        %v355 = vmul.f32 %v354, 1.442695
        %v356 = vpow.pop %v355
        %v357 = vadd.f32 %v356, 1.0
        %v358 = vrcp.pop %v357
        %v359 = vmul.f32 1.0, %v358
        %v360 = vmul.f32 %v350, %v359
        %v361 = vmul.f32 %v360, %v352
        %v362 = vld [vmem:[%s242] sm:$0xff]
        %v363 = vld [vmem:[#allocation7] sm:$0xff]
        %v364 = vld [vmem:[#allocation7 + $0x8] sm:$0xff]
        %v365 = vld [vmem:[#allocation7 + $0x10] sm:$0xff]
        %v366 = vld [vmem:[#allocation7 + $0x18] sm:$0xff]
        %v367 = vld [vmem:[#allocation7 + $0x20] sm:$0xff]
        %v368 = vld [vmem:[#allocation7 + $0x28] sm:$0xff]
        %v369 = vld [vmem:[#allocation7 + $0x30] sm:$0xff]
        %v370 = vld [vmem:[#allocation7 + $0x38] sm:$0xff]
        %v371 = vld [vmem:[#allocation7 + $0x40] sm:$0xff]
        %v372 = vld [vmem:[#allocation7 + $0x48] sm:$0xff]
        %v373 = vld [vmem:[#allocation7 + $0x50] sm:$0xff]
        %v374 = vld [vmem:[#allocation7 + $0x58] sm:$0xff]
        %v375 = vld [vmem:[#allocation7 + $0x60] sm:$0xff]
        %v376 = vld [vmem:[#allocation7 + $0x68] sm:$0xff]
        %v377 = vld [vmem:[#allocation7 + $0x70] sm:$0xff]
        %v378 = vld [vmem:[#allocation7 + $0x78] sm:$0xff]
        %379 = vmatprep.subr.mxu0 0.0
        %380 = vmatpush1.msra.mxu0 %v363
        %381 = vmatprep.subr.mxu0 0.0
        %382 = vmatpush1.msra.mxu0 %v364
        %383 = vmatprep.subr.mxu0 0.0
        %384 = vmatpush1.msra.mxu0 %v365
        %385 = vmatprep.subr.mxu0 0.0
        %386 = vmatpush1.msra.mxu0 %v366
        %387 = vmatprep.subr.mxu0 0.0
        %388 = vmatpush1.msra.mxu0 %v367
        %389 = vmatprep.subr.mxu0 0.0
        %390 = vmatpush1.msra.mxu0 %v368
        %391 = vmatprep.subr.mxu0 0.0
        %392 = vmatpush1.msra.mxu0 %v369
        %393 = vmatprep.subr.mxu0 0.0
        %394 = vmatpush1.msra.mxu0 %v370
        %395 = vmatprep.subr.mxu0 0.0
        %396 = vmatpush1.msra.mxu0 %v371
        %397 = vmatprep.subr.mxu0 0.0
        %398 = vmatpush1.msra.mxu0 %v372
        %399 = vmatprep.subr.mxu0 0.0
        %400 = vmatpush1.msra.mxu0 %v373
        %401 = vmatprep.subr.mxu0 0.0
        %402 = vmatpush1.msra.mxu0 %v374
        %403 = vmatprep.subr.mxu0 0.0
        %404 = vmatpush1.msra.mxu0 %v375
        %405 = vmatprep.subr.mxu0 0.0
        %406 = vmatpush1.msra.mxu0 %v376
        %407 = vmatprep.subr.mxu0 0.0
        %408 = vmatpush1.msra.mxu0 %v377
        %409 = vmatprep.subr.mxu0 0.0
        %410 = vmatpush1.msra.mxu0 %v378
        %411 = vmatprep.subr.mxu0 0.0
        %412 = vmatpush1.msra.mxu0 0.0
        %413 = vmatprep.subr.mxu0 0.0
        %414 = vmatpush1.msra.mxu0 0.0
        %415 = vmatprep.subr.mxu0 0.0
        %416 = vmatpush1.msra.mxu0 0.0
        %417 = vmatprep.subr.mxu0 0.0
        %418 = vmatpush1.msra.mxu0 0.0
        %419 = vmatprep.subr.mxu0 0.0
        %420 = vmatpush1.msra.mxu0 0.0
        %421 = vmatprep.subr.mxu0 0.0
        %422 = vmatpush1.msra.mxu0 0.0
        %423 = vmatprep.subr.mxu0 0.0
        %424 = vmatpush1.msra.mxu0 0.0
        %425 = vmatprep.subr.mxu0 0.0
        %426 = vmatpush1.msra.mxu0 0.0
        %427 = vmatprep.subr.mxu0 0.0
        %428 = vmatpush1.msra.mxu0 0.0
        %429 = vmatprep.subr.mxu0 0.0
        %430 = vmatpush1.msra.mxu0 0.0
        %431 = vmatprep.subr.mxu0 0.0
        %432 = vmatpush1.msra.mxu0 0.0
        %433 = vmatprep.subr.mxu0 0.0
        %434 = vmatpush1.msra.mxu0 0.0
        %435 = vmatprep.subr.mxu0 0.0
        %436 = vmatpush1.msra.mxu0 0.0
        %437 = vmatprep.subr.mxu0 0.0
        %438 = vmatpush1.msra.mxu0 0.0
        %439 = vmatprep.subr.mxu0 0.0
        %440 = vmatpush1.msra.mxu0 0.0
        %441 = vmatprep.subr.mxu0 0.0
        %442 = vmatpush1.msra.mxu0 0.0
        %443 = vmatprep.mubr.f32.mxu0 0.0
        %444 = vmatmul.mubr.f32.gmra.mrb[0].mxu0 %v361
        %v445 = vpop.f32.mrb[0].mxu0
        %v446 = vadd.f32 0.0, %v445
        %v447 = vpop.f32.mrb[0].mxu0
        %448 = vdwg.mxu0
        %v449 = vadd.f32 %v362, %v446
        %450 = vst [vmem:[%s242] sm:$0xff] %v449
        %s451 = sand.u32 %s119, 1
        %s452 = scalar_lea.sflag [#allocation4], %s451
        %s453 = sand.u32 %s119, 1
        %s454 = smul.addr %s453, 8
        %s455 = scalar_lea.vmem [#allocation8], %s454
        // Predicated region
        $region49: #{tpu_custom_call.1} parent=31 // pred_check
          %p456 = pneg %p129
        $region50: #{tpu_custom_call.1} parent=31 // pred_check_branch
          %458 = sbr.rel (%p456) target = $region52
        $region51: #{tpu_custom_call.1} parent=31 // pred_region
          %s460 = ssub.s32 128, 128
          %461 = vsyncadd %s452, %s460
          %s462 = smul.addr %s25, 128
          %s463 = scalar_lea.hbm %s3, %s462
          %s465 = sshll.u32 %s455, 4
          %s466 = int_to_ptr.vmem [resolvable:$true] %s465
          %468 = dma.vmem_to_hbm [thread:$0]  %s466, 128, %s463, %s452
        $region52: #{tpu_custom_call.1} parent=31 // pred_fallthru
          _
      $region32: #{tpu_custom_call.1} parent=5 // pred_fallthru
        _
      %p469 = scmp.le.s32.totalorder 2, %s16
      // Predicated region
      $region53: #{tpu_custom_call.1} parent=5 // pred_check
        %p470 = pneg %p469
      $region54: #{tpu_custom_call.1} parent=5 // pred_check_branch
        %472 = sbr.rel (%p470) target = $region56
      $region55: #{tpu_custom_call.1} parent=5 // pred_region
        %s473 = ssub.s32 %s16, 2
        // Predicated region
        $region57: #{tpu_custom_call.1} parent=55 // pred_check
          %p474 = pneg %p135
        $region58: #{tpu_custom_call.1} parent=55 // pred_check_branch
          %476 = sbr.rel (%p474) target = $region60
        $region59: #{tpu_custom_call.1} parent=55 // pred_region
          %s477 = sand.u32 %s120, 1
          %s478 = scalar_lea.sflag [#allocation4], %s477
          %s479 = sand.u32 %s120, 1
          %s480 = smul.addr %s479, 8
          %s481 = scalar_lea.vmem [#allocation8], %s480
          %482 = dma.done %s478, 128
        $region60: #{tpu_custom_call.1} parent=55 // pred_fallthru
          _
      $region56: #{tpu_custom_call.1} parent=5 // pred_fallthru
        _
    $region6: #{tpu_custom_call.1} parent=1 // loop_footer
      %s20 = sadd.s32 1, %s16
    $region7: #{tpu_custom_call.1} parent=1 // loop_footer_branch
      %15 = sbr.rel target = $region3
    $region8: #{tpu_custom_call.1} parent=1 // loop_exit
      _
    %483 = vsyncpa [#allocation3], 1
    %s484 = scalar_lea.sflag [#allocation3], 1
    %485 = vsyncpa %s484, 1
    %486 = vsyncpa [#allocation6], 1
    %487 = vsyncpa [#allocation4], 1
    %s488 = scalar_lea.sflag [#allocation4], 1
    %489 = vsyncpa %s488, 1

</llo_original>
